<compile_context>
chip_gen: v5e
topology: v5e:2x2
jax: 0.10.0
libtpu: 0.0.40
codegen_flags: <defaults>
</compile_context>

<pallas_src>
import numpy as np
import jax
import jax.numpy as jnp
from jax import lax
from jax.experimental import pallas as pl
from jax.experimental.pallas import tpu as pltpu

N, C, H, W = 2, 3, 4, 4          # batch, channels, spatial (from weight shape (1,3,4,4))
K = 3                            # conv kernel size, padding=1, stride=1
HW = H * W                       # 16 spatial positions
L = N * HW                       # 32 output positions per channel (lane dim)
PAD = 8                          # one-sided zero lane-pad for masked-shift im2col
KDIM = 32                        # padded contraction dim (27 taps + bias row + zeros)
MDIM = 8                         # padded output-channel dim for the MXU dot


def _shift_and_mask_tables():
    """Per-tap lane shift and validity mask (input-independent constants)."""
    shifts = []
    maskfull = np.zeros((KDIM, L), np.float32)
    for t in range(K * K):
        di, dj = t // K, t % K
        shifts.append((di - 1) * W + (dj - 1))
        for n in range(N):
            for h in range(H):
                for w in range(W):
                    if 0 <= h + di - 1 < H and 0 <= w + dj - 1 < W:
                        maskfull[t * C:(t + 1) * C, n * HW + h * W + w] = 1.0
    maskfull[K * K * C, :] = 1.0          # bias row stays ones
    return tuple(shifts), maskfull


SHIFTS, MASKFULL = _shift_and_mask_tables()


def model_kernel(wmat_ref,   # VMEM (8, 32): conv weight [co, di*9+dj*3+ci], col 27 = 2*bias
                 ws_ref,     # VMEM (6, 16): layer weights, rows = layer*C + ci, lanes = h*4+w
                 mask_ref,   # VMEM (32, 32): per-row window-validity mask (row 27 = ones)
                 ins_ref,    # VMEM (12, 32): inputs, rows = input*C + ci, lanes = n*16+h*4+w
                 out_ref):   # VMEM (8, 32): rows 0..2 = conv output channels, lanes = n*16+h*4+w
    # ---- fused custom op (MyStrangeOp2) on both branches, lane-dense ------------
    ins = ins_ref[...]                                     # (12, 32)
    ws = ws_ref[...]                                       # (6, 16)
    wsb = jnp.concatenate([ws, ws], axis=1)                # (6, 32): batch broadcast in-kernel
    # conv linearity: conv1(x1) + conv1(x2) == conv1(x1 + x2) + 2*bias
    xs = (ins[0:C] + ins[C:2 * C]) * wsb[0:C] \
       + (ins[2 * C:3 * C] + ins[3 * C:4 * C]) * wsb[C:2 * C]       # (3, 32)

    # ---- im2col via masked lane shifts (zero ring built with lane concat) -------
    zpad = jnp.zeros((C, PAD), jnp.float32)
    xsp = jnp.concatenate([zpad, xs, zpad], axis=1)        # (3, 48)
    pieces = [xsp[:, PAD + s: PAD + s + L] for s in SHIFTS]          # 9 x (3, 32)
    pieces.append(jnp.ones((KDIM - K * K * C, L), jnp.float32))      # bias row + K padding
    raw = jnp.concatenate(pieces, axis=0)                  # (32, 32)
    patches = raw * mask_ref[...]                          # zero out-of-window lanes

    # ---- one MXU dot replaces the 81-tap scalar unroll (bias folded in) ---------
    out = jnp.dot(wmat_ref[...], patches,
                  preferred_element_type=jnp.float32,
                  precision=lax.Precision.HIGHEST)         # (8, 32)
    out_ref[...] = out                                     # single dense store


def model_forward(in1, in2, in3, in4, w1, w2, conv_w, conv_b):
    """in*: (N,C,H,W) f32; w1/w2: (1,C,H,W); conv_w: (C,C,3,3); conv_b: (C,)."""
    f32 = jnp.float32
    # lane-dense input slab: (4,N,C,H,W) -> (4,C,N,H,W) -> (12, 32)
    ins = jnp.stack([in1, in2, in3, in4]).astype(f32)
    ins = ins.transpose(0, 2, 1, 3, 4).reshape(4 * C, L)
    # layer weights: (2,C,H,W) -> (6, 16); batch broadcast happens in-kernel
    ws = jnp.concatenate([w1, w2], axis=0).astype(f32).reshape(2 * C, HW)

    # conv weight as (8, 32) matrix: [co, di*9 + dj*3 + ci], plus a 2*bias column
    wmat = conv_w.astype(f32).transpose(0, 2, 3, 1).reshape(C, C * K * K)
    wmat_p = jnp.zeros((MDIM, KDIM), f32)
    wmat_p = wmat_p.at[0:C, 0:C * K * K].set(wmat)
    wmat_p = wmat_p.at[0:C, C * K * K].set(2.0 * conv_b.astype(f32))

    out = pl.pallas_call(
        model_kernel,
        out_shape=jax.ShapeDtypeStruct((MDIM, L), jnp.float32),
        in_specs=[pl.BlockSpec(memory_space=pltpu.MemorySpace.VMEM)] * 4,
        out_specs=pl.BlockSpec(memory_space=pltpu.MemorySpace.VMEM),
    )(wmat_p, ws, jnp.asarray(MASKFULL), ins)

    # free layout plumbing back to NCHW
    return out[0:C].reshape(C, N, H, W).transpose(1, 0, 2, 3)


def reference_forward(in1, in2, in3, in4, w1, w2, conv_w, conv_b):
    """Plain-JAX reference of the PyTorch forward pass."""
    x1 = (in1 + in2) * w1
    x2 = (in3 + in4) * w2

    def conv(x):
        y = lax.conv_general_dilated(
            x, conv_w, window_strides=(1, 1), padding=[(1, 1), (1, 1)],
            dimension_numbers=("NCHW", "OIHW", "NCHW"),
            precision=lax.Precision.HIGHEST)
        return y + conv_b[None, :, None, None]

    return conv(x1) + conv(x2)   # model uses conv1 for both branches


if __name__ == "__main__":
    key = jax.random.PRNGKey(0)
    k1, k2, k3, k4, kw, kb = jax.random.split(key, 6)

    in1 = jax.random.normal(k1, (N, C, H, W), dtype=jnp.float32)
    in2 = jax.random.normal(k2, (N, C, H, W), dtype=jnp.float32)
    in3 = jax.random.normal(k3, (N, C, H, W), dtype=jnp.float32)
    in4 = jax.random.normal(k4, (N, C, H, W), dtype=jnp.float32)

    # parameters: layer weights are torch.ones(1,3,4,4) in the original module
    w1 = jnp.ones((1, C, H, W), dtype=jnp.float32)
    w2 = jnp.ones((1, C, H, W), dtype=jnp.float32)
    conv_w = 0.1 * jax.random.normal(kw, (C, C, K, K), dtype=jnp.float32)
    conv_b = 0.1 * jax.random.normal(kb, (C,), dtype=jnp.float32)

    out = jax.jit(model_forward)(in1, in2, in3, in4, w1, w2, conv_w, conv_b)
    out = jax.block_until_ready(out)

    ref = reference_forward(in1, in2, in3, in4, w1, w2, conv_w, conv_b)
    np.testing.assert_allclose(np.asarray(out), np.asarray(ref), rtol=1e-4, atol=2e-5)

    print("KERNEL_OK")
</pallas_src>

<mosaic_0001>
module attributes {stable_mosaic.version = 11 : i64} {
  func.func @model_kernel(%arg0: memref<8x32xf32, #tpu.memory_space<vmem>>, %arg1: memref<6x16xf32, #tpu.memory_space<vmem>>, %arg2: memref<32x32xf32, #tpu.memory_space<vmem>>, %arg3: memref<12x32xf32, #tpu.memory_space<vmem>>, %arg4: memref<8x32xf32, #tpu.memory_space<vmem>>) attributes {dimension_semantics = [], scalar_prefetch = 0 : i64, scratch_operands = 0 : i64, tpu.core_type = #tpu.core_type<tc>} {
    %c0 = arith.constant 0 : index
    %c0_0 = arith.constant 0 : index
    %0 = vector.load %arg3[%c0, %c0_0] : memref<12x32xf32, #tpu.memory_space<vmem>>, vector<12x32xf32>
    %c0_1 = arith.constant 0 : index
    %c0_2 = arith.constant 0 : index
    %1 = vector.load %arg1[%c0_1, %c0_2] : memref<6x16xf32, #tpu.memory_space<vmem>>, vector<6x16xf32>
    %2 = tpu.concatenate %1, %1 in 1 : vector<6x16xf32>, vector<6x16xf32> -> vector<6x32xf32>
    %3 = vector.extract_strided_slice %0 {offsets = [0, 0], sizes = [3, 32], strides = [1, 1]} : vector<12x32xf32> to vector<3x32xf32>
    %4 = vector.extract_strided_slice %0 {offsets = [3, 0], sizes = [3, 32], strides = [1, 1]} : vector<12x32xf32> to vector<3x32xf32>
    %5 = arith.addf %3, %4 : vector<3x32xf32>
    %6 = vector.extract_strided_slice %2 {offsets = [0, 0], sizes = [3, 32], strides = [1, 1]} : vector<6x32xf32> to vector<3x32xf32>
    %7 = arith.mulf %5, %6 : vector<3x32xf32>
    %8 = vector.extract_strided_slice %0 {offsets = [6, 0], sizes = [3, 32], strides = [1, 1]} : vector<12x32xf32> to vector<3x32xf32>
    %9 = vector.extract_strided_slice %0 {offsets = [9, 0], sizes = [3, 32], strides = [1, 1]} : vector<12x32xf32> to vector<3x32xf32>
    %10 = arith.addf %8, %9 : vector<3x32xf32>
    %11 = vector.extract_strided_slice %2 {offsets = [3, 0], sizes = [3, 32], strides = [1, 1]} : vector<6x32xf32> to vector<3x32xf32>
    %12 = arith.mulf %10, %11 : vector<3x32xf32>
    %13 = arith.addf %7, %12 : vector<3x32xf32>
    %cst = arith.constant 0.000000e+00 : f32
    %14 = vector.broadcast %cst : f32 to vector<3x8xf32>
    %15 = tpu.concatenate %14, %13, %14 in 1 : vector<3x8xf32>, vector<3x32xf32>, vector<3x8xf32> -> vector<3x48xf32>
    %16 = vector.extract_strided_slice %15 {offsets = [0, 3], sizes = [3, 32], strides = [1, 1]} : vector<3x48xf32> to vector<3x32xf32>
    %17 = vector.extract_strided_slice %15 {offsets = [0, 4], sizes = [3, 32], strides = [1, 1]} : vector<3x48xf32> to vector<3x32xf32>
    %18 = vector.extract_strided_slice %15 {offsets = [0, 5], sizes = [3, 32], strides = [1, 1]} : vector<3x48xf32> to vector<3x32xf32>
    %19 = vector.extract_strided_slice %15 {offsets = [0, 7], sizes = [3, 32], strides = [1, 1]} : vector<3x48xf32> to vector<3x32xf32>
    %20 = vector.extract_strided_slice %15 {offsets = [0, 8], sizes = [3, 32], strides = [1, 1]} : vector<3x48xf32> to vector<3x32xf32>
    %21 = vector.extract_strided_slice %15 {offsets = [0, 9], sizes = [3, 32], strides = [1, 1]} : vector<3x48xf32> to vector<3x32xf32>
    %22 = vector.extract_strided_slice %15 {offsets = [0, 11], sizes = [3, 32], strides = [1, 1]} : vector<3x48xf32> to vector<3x32xf32>
    %23 = vector.extract_strided_slice %15 {offsets = [0, 12], sizes = [3, 32], strides = [1, 1]} : vector<3x48xf32> to vector<3x32xf32>
    %24 = vector.extract_strided_slice %15 {offsets = [0, 13], sizes = [3, 32], strides = [1, 1]} : vector<3x48xf32> to vector<3x32xf32>
    %cst_3 = arith.constant 1.000000e+00 : f32
    %25 = vector.broadcast %cst_3 : f32 to vector<5x32xf32>
    %26 = tpu.concatenate %16, %17, %18, %19, %20, %21, %22, %23, %24, %25 in 0 : vector<3x32xf32>, vector<3x32xf32>, vector<3x32xf32>, vector<3x32xf32>, vector<3x32xf32>, vector<3x32xf32>, vector<3x32xf32>, vector<3x32xf32>, vector<3x32xf32>, vector<5x32xf32> -> vector<32x32xf32>
    %c0_4 = arith.constant 0 : index
    %c0_5 = arith.constant 0 : index
    %27 = vector.load %arg2[%c0_4, %c0_5] : memref<32x32xf32, #tpu.memory_space<vmem>>, vector<32x32xf32>
    %28 = arith.mulf %26, %27 : vector<32x32xf32>
    %c0_6 = arith.constant 0 : index
    %c0_7 = arith.constant 0 : index
    %29 = vector.load %arg0[%c0_6, %c0_7] : memref<8x32xf32, #tpu.memory_space<vmem>>, vector<8x32xf32>
    %cst_8 = arith.constant dense<0.000000e+00> : vector<8x32xf32>
    %30 = tpu.matmul %29, %28, %cst_8 {dimension_numbers = #tpu.dot_dimension_numbers<[1], [0], [0], [1], [0, 0, 1, 1], [], []>, precision = #tpu.contract_precision<fp32>} : vector<8x32xf32>, vector<32x32xf32>, vector<8x32xf32> -> vector<8x32xf32>
    %c0_9 = arith.constant 0 : index
    %c0_10 = arith.constant 0 : index
    %31 = vector.load %arg4[%c0_9, %c0_10] : memref<8x32xf32, #tpu.memory_space<vmem>>, vector<8x32xf32>
    tpu.vector_store %arg4[%c0_9, %c0_10], %30 {strides = array<i32>} : memref<8x32xf32, #tpu.memory_space<vmem>>, vector<8x32xf32>,
    return
  }
}

</mosaic_0001>

<llo_original>
// kernel: model_forward.1
$region0: #{model_forward.1}
  #allocation0 [shape = 'u32[]', space=smem, size = 0x4, offset = 0x4, fixed_abs, tag = 'smem constant byte address 0x4 - core index']
  #allocation1 [shape = 'u32[72,128]{1,0:T(1,128)}', space=vmem, size = 0x9000, scoped, tag = 'internal scratch']
  %s0 = inlined_call_operand.vmem [shape: f32[8,32], index: 0, kind: input, shape index: {}]
  %s1 = inlined_call_operand.vmem [shape: f32[6,16], index: 1, kind: input, shape index: {}]
  %s2 = inlined_call_operand.vmem [shape: f32[32,32], index: 2, kind: input, shape index: {}]
  %s3 = inlined_call_operand.vmem [shape: f32[12,32], index: 3, kind: input, shape index: {}]
  %s4 = inlined_call_operand.vmem [shape: f32[8,32], index: 4, kind: output, shape index: {}]
  %s5 = sld [smem:[#allocation0]]
  $region26: #{model_forward.1} parent=0
    _
  %s7 = ssub.s32 1, %s5
  %s8 = scalar_select 0, %s7, %s5
  // Predicated region
  $region2: #{model_forward.1} parent=0 // pred_check
    _
  $region3: #{model_forward.1} parent=0 // pred_check_branch
    %10 = sbr.rel (0) target = $region5
  $region4: #{model_forward.1} parent=0 // pred_region
    _
  $region5: #{model_forward.1} parent=0 // pred_fallthru
    _
  // Predicated region
  $region6: #{model_forward.1} parent=0 // pred_check
    _
  $region7: #{model_forward.1} parent=0 // pred_check_branch
    %12 = sbr.rel (0) target = $region9
  $region8: #{model_forward.1} parent=0 // pred_region
    _
  $region9: #{model_forward.1} parent=0 // pred_fallthru
    _
  // Predicated region
  $region10: #{model_forward.1} parent=0 // pred_check
    _
  $region11: #{model_forward.1} parent=0 // pred_check_branch
    %14 = sbr.rel (0) target = $region13
  $region12: #{model_forward.1} parent=0 // pred_region
    _
  $region13: #{model_forward.1} parent=0 // pred_fallthru
    _
  // Predicated region
  $region14: #{model_forward.1} parent=0 // pred_check
    _
  $region15: #{model_forward.1} parent=0 // pred_check_branch
    %16 = sbr.rel (0) target = $region17
  $region16: #{model_forward.1} parent=0 // pred_region
    _
  $region17: #{model_forward.1} parent=0 // pred_fallthru
    _
  %v17 = vld [vmem:[%s3] sm:$0xff]
  %v18 = vld [vmem:[%s3 + $0x8] sm:$0xf]
  %v19 = vld [vmem:[%s1] sm:$0x3f]
  %21 = vrot.lane.b32.xlu0 %v19, 16
  %v22 = vpop.permute.xlu0 %21
  %vm24 = vcmask 130048
  %v25 = vsel %vm24, %v19, %v22
  %v27 = vrot.slane %v17, 3
  %v29 = vadd.f32 %v17, %v27
  %v30 = vmul.f32 %v29, %v25
  %v32 = vrot.slane %v18, 3
  %v34 = vadd.f32 %v17, %v32
  %v35 = vadd.f32 %v18, %v32
  %v37 = vrot.slane %v25, 5
  %v39 = vmul.f32 %v34, %v37
  %v40 = vmul.f32 %v35, %v37
  %vm43 = vcmask 1041408
  %v44 = vrot.slane %v39, 6
  %v45 = vrot.slane %v40, 6
  %v46 = vsel %vm43, %v44, %v45
  %v48 = vadd.f32 %v30, %v46
  %50 = vrot.lane.b32.xlu0 %v48, 8
  %v51 = vpop.permute.xlu0 %50
  %vm53 = vcmask 64512
  %v54 = vsel %vm53, 0.0, %v51
  %vm55 = vcmask 326656
  %v56 = vsel %vm55, %v54, 0.0
  %v58 = vrot.slane %v56, 5
  %59 = vrot.lane.b32.xlu0 %v58, 127
  %v60 = vpop.permute.xlu0 %59
  %v62 = vrot.slane %v56, 2
  %63 = vrot.lane.b32.xlu0 %v62, 126
  %v64 = vpop.permute.xlu0 %63
  %v66 = vrot.slane %v56, 7
  %67 = vrot.lane.b32.xlu0 %v66, 124
  %v68 = vpop.permute.xlu0 %67
  %v70 = vrot.slane %v56, 4
  %71 = vrot.lane.b32.xlu0 %v70, 123
  %v72 = vpop.permute.xlu0 %71
  %v74 = vrot.slane %v56, 1
  %75 = vrot.lane.b32.xlu0 %v74, 122
  %v76 = vpop.permute.xlu0 %75
  %v78 = vrot.slane %v56, 6
  %79 = vrot.lane.b32.xlu0 %v78, 120
  %v80 = vpop.permute.xlu0 %79
  %v82 = vrot.slane %v56, 3
  %83 = vrot.lane.b32.xlu0 %v82, 119
  %v84 = vpop.permute.xlu0 %83
  %86 = vrot.lane.b32.xlu0 %v56, 118
  %v87 = vpop.permute.xlu0 %86
  %vm89 = vcmask 1042432
  %v90 = vsel %vm89, %v56, %v60
  %vm91 = vcmask 1045504
  %v92 = vsel %vm91, %v90, %v64
  %vm93 = vcmask 1040384
  %v94 = vsel %vm93, %v64, %v68
  %vm95 = vcmask 1043456
  %v96 = vsel %vm95, %v94, %v72
  %vm97 = vcmask 1046528
  %v98 = vsel %vm97, %v96, %v76
  %v99 = vsel %vm43, %v76, %v80
  %vm100 = vcmask 1044480
  %v101 = vsel %vm100, %v99, %v84
  %v102 = vsel %vm89, %v87, 1.0
  %v103 = vld [vmem:[%s2] sm:$0xff]
  %v104 = vld [vmem:[%s2 + $0x8] sm:$0xff]
  %v105 = vld [vmem:[%s2 + $0x10] sm:$0xff]
  %v106 = vld [vmem:[%s2 + $0x18] sm:$0xff]
  %111 = vrot.lane.b32.xlu0 %v103, 3
  %v112 = vpop.permute.xlu0 %111
  %113 = vrot.lane.b32.xlu0 %v104, 3
  %v114 = vpop.permute.xlu0 %113
  %115 = vrot.lane.b32.xlu0 %v105, 3
  %v116 = vpop.permute.xlu0 %115
  %117 = vrot.lane.b32.xlu0 %v106, 3
  %v118 = vpop.permute.xlu0 %117
  %v123 = vmul.f32 %v92, %v112
  %v124 = vmul.f32 %v98, %v114
  %v125 = vmul.f32 %v101, %v116
  %v126 = vmul.f32 %v102, %v118
  %v127 = vld [vmem:[%s0] sm:$0xff]
  %132 = vrot.lane.b32.xlu0 %v123, 125
  %v133 = vpop.permute.xlu0 %132
  %134 = vrot.lane.b32.xlu0 %v124, 125
  %v135 = vpop.permute.xlu0 %134
  %136 = vrot.lane.b32.xlu0 %v125, 125
  %v137 = vpop.permute.xlu0 %136
  %138 = vrot.lane.b32.xlu0 %v126, 125
  %v139 = vpop.permute.xlu0 %138
  %vm144 = vcmask 261120
  %v146 = vsel %vm144, %v127, 0
  %148 = vmatpush.msra.mxu0 0.0
  %149 = vmatpush.msra.mxu0 0.0
  %150 = vmatpush.msra.mxu0 0.0
  %151 = vmatpush.msra.mxu0 0.0
  %152 = vmatpush.msra.mxu0 0.0
  %153 = vmatpush.msra.mxu0 0.0
  %154 = vmatpush.msra.mxu0 0.0
  %155 = vmatpush.msra.mxu0 0.0
  %156 = vmatpush.msra.mxu0 0.0
  %157 = vmatpush.msra.mxu0 0.0
  %158 = vmatpush.msra.mxu0 0.0
  %159 = vmatpush.msra.mxu0 0.0
  %v160 = vand.u32 %v139, 4294901760
  %161 = vmatpush.msra.mxu0 %v160
  %v162 = vand.u32 %v137, 4294901760
  %163 = vmatpush.msra.mxu0 %v162
  %v164 = vand.u32 %v135, 4294901760
  %165 = vmatpush.msra.mxu0 %v164
  %v166 = vand.u32 %v133, 4294901760
  %167 = vmatpush.msra.mxu0 %v166
  %v168 = vand.u32 %v146, 4294901760
  %v169 = vsub.f32 %v146, %v168
  %v170 = vand.u32 %v169, 4294901760
  %v171 = vsub.f32 %v169, %v170
  %v172 = vand.u32 %v171, 4294901760
  %173 = vmatmul.f32.gmra.mxu0 %v172
  %v174 = vpop.f32.mrf.mxu0
  %v175 = vadd.f32 0.0, %v174
  %176 = vdwg.mxu0
  %177 = vmatpush.msra.mxu0 0.0
  %178 = vmatpush.msra.mxu0 0.0
  %179 = vmatpush.msra.mxu0 0.0
  %180 = vmatpush.msra.mxu0 0.0
  %181 = vmatpush.msra.mxu0 0.0
  %182 = vmatpush.msra.mxu0 0.0
  %183 = vmatpush.msra.mxu0 0.0
  %184 = vmatpush.msra.mxu0 0.0
  %185 = vmatpush.msra.mxu0 0.0
  %186 = vmatpush.msra.mxu0 0.0
  %187 = vmatpush.msra.mxu0 0.0
  %188 = vmatpush.msra.mxu0 0.0
  %v189 = vand.u32 %v139, 4294901760
  %v190 = vsub.f32 %v139, %v189
  %v191 = vand.u32 %v190, 4294901760
  %v192 = vsub.f32 %v190, %v191
  %v193 = vand.u32 %v192, 4294901760
  %194 = vmatpush.msra.mxu0 %v193
  %v195 = vand.u32 %v137, 4294901760
  %v196 = vsub.f32 %v137, %v195
  %v197 = vand.u32 %v196, 4294901760
  %v198 = vsub.f32 %v196, %v197
  %v199 = vand.u32 %v198, 4294901760
  %200 = vmatpush.msra.mxu0 %v199
  %v201 = vand.u32 %v135, 4294901760
  %v202 = vsub.f32 %v135, %v201
  %v203 = vand.u32 %v202, 4294901760
  %v204 = vsub.f32 %v202, %v203
  %v205 = vand.u32 %v204, 4294901760
  %206 = vmatpush.msra.mxu0 %v205
  %v207 = vand.u32 %v133, 4294901760
  %v208 = vsub.f32 %v133, %v207
  %v209 = vand.u32 %v208, 4294901760
  %v210 = vsub.f32 %v208, %v209
  %v211 = vand.u32 %v210, 4294901760
  %212 = vmatpush.msra.mxu0 %v211
  %v213 = vand.u32 %v146, 4294901760
  %214 = vmatmul.f32.gmra.mxu0 %v213
  %v215 = vpop.f32.mrf.mxu0
  %v216 = vadd.f32 %v175, %v215
  %217 = vdwg.mxu0
  %218 = vmatpush.msra.mxu0 0.0
  %219 = vmatpush.msra.mxu0 0.0
  %220 = vmatpush.msra.mxu0 0.0
  %221 = vmatpush.msra.mxu0 0.0
  %222 = vmatpush.msra.mxu0 0.0
  %223 = vmatpush.msra.mxu0 0.0
  %224 = vmatpush.msra.mxu0 0.0
  %225 = vmatpush.msra.mxu0 0.0
  %226 = vmatpush.msra.mxu0 0.0
  %227 = vmatpush.msra.mxu0 0.0
  %228 = vmatpush.msra.mxu0 0.0
  %229 = vmatpush.msra.mxu0 0.0
  %v230 = vand.u32 %v139, 4294901760
  %v231 = vsub.f32 %v139, %v230
  %232 = vmatpush.msra.mxu0 %v231
  %v233 = vand.u32 %v137, 4294901760
  %v234 = vsub.f32 %v137, %v233
  %235 = vmatpush.msra.mxu0 %v234
  %v236 = vand.u32 %v135, 4294901760
  %v237 = vsub.f32 %v135, %v236
  %238 = vmatpush.msra.mxu0 %v237
  %v239 = vand.u32 %v133, 4294901760
  %v240 = vsub.f32 %v133, %v239
  %241 = vmatpush.msra.mxu0 %v240
  %v242 = vand.u32 %v146, 4294901760
  %v243 = vsub.f32 %v146, %v242
  %244 = vmatmul.f32.gmra.mxu0 %v243
  %v245 = vpop.f32.mrf.mxu0
  %v246 = vadd.f32 %v216, %v245
  %247 = vdwg.mxu0
  %248 = vmatpush.msra.mxu0 0.0
  %249 = vmatpush.msra.mxu0 0.0
  %250 = vmatpush.msra.mxu0 0.0
  %251 = vmatpush.msra.mxu0 0.0
  %252 = vmatpush.msra.mxu0 0.0
  %253 = vmatpush.msra.mxu0 0.0
  %254 = vmatpush.msra.mxu0 0.0
  %255 = vmatpush.msra.mxu0 0.0
  %256 = vmatpush.msra.mxu0 0.0
  %257 = vmatpush.msra.mxu0 0.0
  %258 = vmatpush.msra.mxu0 0.0
  %259 = vmatpush.msra.mxu0 0.0
  %v260 = vand.u32 %v139, 4294901760
  %261 = vmatpush.msra.mxu0 %v260
  %v262 = vand.u32 %v137, 4294901760
  %263 = vmatpush.msra.mxu0 %v262
  %v264 = vand.u32 %v135, 4294901760
  %265 = vmatpush.msra.mxu0 %v264
  %v266 = vand.u32 %v133, 4294901760
  %267 = vmatpush.msra.mxu0 %v266
  %v268 = vand.u32 %v146, 4294901760
  %v269 = vsub.f32 %v146, %v268
  %v270 = vand.u32 %v269, 4294901760
  %271 = vmatmul.f32.gmra.mxu0 %v270
  %v272 = vpop.f32.mrf.mxu0
  %v273 = vadd.f32 %v246, %v272
  %274 = vdwg.mxu0
  %275 = vmatpush.msra.mxu0 0.0
  %276 = vmatpush.msra.mxu0 0.0
  %277 = vmatpush.msra.mxu0 0.0
  %278 = vmatpush.msra.mxu0 0.0
  %279 = vmatpush.msra.mxu0 0.0
  %280 = vmatpush.msra.mxu0 0.0
  %281 = vmatpush.msra.mxu0 0.0
  %282 = vmatpush.msra.mxu0 0.0
  %283 = vmatpush.msra.mxu0 0.0
  %284 = vmatpush.msra.mxu0 0.0
  %285 = vmatpush.msra.mxu0 0.0
  %286 = vmatpush.msra.mxu0 0.0
  %v287 = vand.u32 %v139, 4294901760
  %v288 = vsub.f32 %v139, %v287
  %v289 = vand.u32 %v288, 4294901760
  %290 = vmatpush.msra.mxu0 %v289
  %v291 = vand.u32 %v137, 4294901760
  %v292 = vsub.f32 %v137, %v291
  %v293 = vand.u32 %v292, 4294901760
  %294 = vmatpush.msra.mxu0 %v293
  %v295 = vand.u32 %v135, 4294901760
  %v296 = vsub.f32 %v135, %v295
  %v297 = vand.u32 %v296, 4294901760
  %298 = vmatpush.msra.mxu0 %v297
  %v299 = vand.u32 %v133, 4294901760
  %v300 = vsub.f32 %v133, %v299
  %v301 = vand.u32 %v300, 4294901760
  %302 = vmatpush.msra.mxu0 %v301
  %v303 = vand.u32 %v146, 4294901760
  %304 = vmatmul.f32.gmra.mxu0 %v303
  %v305 = vpop.f32.mrf.mxu0
  %v306 = vadd.f32 %v273, %v305
  %307 = vdwg.mxu0
  %308 = vmatpush.msra.mxu0 0.0
  %309 = vmatpush.msra.mxu0 0.0
  %310 = vmatpush.msra.mxu0 0.0
  %311 = vmatpush.msra.mxu0 0.0
  %312 = vmatpush.msra.mxu0 0.0
  %313 = vmatpush.msra.mxu0 0.0
  %314 = vmatpush.msra.mxu0 0.0
  %315 = vmatpush.msra.mxu0 0.0
  %316 = vmatpush.msra.mxu0 0.0
  %317 = vmatpush.msra.mxu0 0.0
  %318 = vmatpush.msra.mxu0 0.0
  %319 = vmatpush.msra.mxu0 0.0
  %v320 = vand.u32 %v139, 4294901760
  %321 = vmatpush.msra.mxu0 %v320
  %v322 = vand.u32 %v137, 4294901760
  %323 = vmatpush.msra.mxu0 %v322
  %v324 = vand.u32 %v135, 4294901760
  %325 = vmatpush.msra.mxu0 %v324
  %v326 = vand.u32 %v133, 4294901760
  %327 = vmatpush.msra.mxu0 %v326
  %v328 = vand.u32 %v146, 4294901760
  %329 = vmatmul.f32.gmra.mxu0 %v328
  %v330 = vpop.f32.mrf.mxu0
  %v331 = vadd.f32 %v306, %v330
  %332 = vdwg.mxu0
  %333 = vst.msk [vmem:[%s4] sm:$0xff] %vm144, %v331
  // Predicated region
  $region18: #{model_forward.1} parent=0 // pred_check
    _
  $region19: #{model_forward.1} parent=0 // pred_check_branch
    %335 = sbr.rel (0) target = $region21
  $region20: #{model_forward.1} parent=0 // pred_region
    _
  $region21: #{model_forward.1} parent=0 // pred_fallthru
    _
  // Predicated region
  $region22: #{model_forward.1} parent=0 // pred_check
    _
  $region23: #{model_forward.1} parent=0 // pred_check_branch
    %337 = sbr.rel (0) target = $region25
  $region24: #{model_forward.1} parent=0 // pred_region
    _
  $region25: #{model_forward.1} parent=0 // pred_fallthru
    _

</llo_original>
